<compile_context>
chip_gen: v5e
topology: v5e:2x2
jax: 0.10.0
libtpu: 0.0.40
codegen_flags: <defaults>
</compile_context>

<pallas_src>
import functools

import jax
import jax.numpy as jnp
from jax.experimental import pallas as pl
from jax.experimental.pallas import tpu as pltpu


def _deepnormal_kernel(x_ref, g_ref, b_ref, o_ref, *, eps, cd):
    # x_ref block: (Nb, CD, T); g_ref/b_ref: (CD, 1) -> broadcast over (Nb, ., T)
    x = x_ref[...].astype(jnp.float32)                              # (Nb, CD, T)
    mean = jnp.mean(x, axis=1, keepdims=True)                       # (Nb, 1, T)
    diff = x - mean
    # torch.std uses the unbiased estimator (ddof=1).
    var = jnp.sum(diff * diff, axis=1, keepdims=True) * (1.0 / (cd - 1))
    d = jnp.sqrt(var) + eps                                         # (Nb, 1, T)
    # Approx reciprocal lands on the EUP slot; two Newton refinements on the
    # tiny (Nb, 1, T) array recover exact-division accuracy (~1e-7 rel).
    r = pl.reciprocal(d, approx=True)
    r = r * (2.0 - d * r)
    r = r * (2.0 - d * r)
    scale = g_ref[...] * r                                          # (Nb, CD, T)
    o_ref[...] = (diff * scale + b_ref[...]).astype(o_ref.dtype)


def _pick_tile_hw(hw, max_cols):
    """Largest multiple-of-128 divisor of hw that fits max_cols (lane-dense
    stores + (8,128) tiling); fall back to the smallest such divisor, else hw
    itself (full-extent blocks are always legal)."""
    best = None
    smallest = None
    t = 128
    while t <= hw:
        if hw % t == 0:
            if smallest is None:
                smallest = t
            if t <= max_cols:
                best = t
        t += 128
    if best is not None:
        return best
    if smallest is not None:
        return smallest
    return hw


def _pick_batch_fold(n, per_n_bytes, target_bytes):
    """Fold several batch elements into one block when a single-n slab is
    small, so each DMA moves a decent chunk."""
    if per_n_bytes >= target_bytes // 2:
        return 1
    nb = 1
    for cand in range(1, n + 1):
        if n % cand == 0 and cand * per_n_bytes <= target_bytes:
            nb = cand
    return nb


def deep_normal_3d(x, gamma, beta, *, group_num, eps=1e-10,
                   target_block_bytes=1 << 20):
    N, C, D, H, W = x.shape
    assert D == group_num, "x.view(N, group_num*C, H, W) requires D == group_num"
    assert C == group_num, "gamma (group_num,1,1,1) broadcast requires C == group_num"
    CD, HW = C * D, H * W

    itemsize = jnp.dtype(x.dtype).itemsize
    max_cols = max(1, target_block_bytes // (CD * itemsize))
    tile_hw = _pick_tile_hw(HW, max_cols)
    assert HW % tile_hw == 0
    assert tile_hw % 128 == 0 or tile_hw == HW  # lane-dense / full-extent only
    nb = _pick_batch_fold(N, CD * tile_hw * itemsize, target_block_bytes)

    x2 = x.reshape(N, CD, HW)
    # gamma/beta index the C component of the flattened (C*D) axis: cd // D.
    g_full = jnp.repeat(gamma.reshape(group_num), D).reshape(CD, 1).astype(jnp.float32)
    b_full = jnp.repeat(beta.reshape(group_num), D).reshape(CD, 1).astype(jnp.float32)

    kernel = functools.partial(_deepnormal_kernel, eps=eps, cd=CD)
    out = pl.pallas_call(
        kernel,
        out_shape=jax.ShapeDtypeStruct((N, CD, HW), x.dtype),
        grid_spec=pltpu.PrefetchScalarGridSpec(
            num_scalar_prefetch=0,
            grid=(N // nb, HW // tile_hw),
            in_specs=[
                pl.BlockSpec((nb, CD, tile_hw), lambda n, j: (n, 0, j)),
                pl.BlockSpec((CD, 1), lambda n, j: (0, 0)),
                pl.BlockSpec((CD, 1), lambda n, j: (0, 0)),
            ],
            out_specs=pl.BlockSpec((nb, CD, tile_hw), lambda n, j: (n, 0, j)),
        ),
        compiler_params=pltpu.CompilerParams(
            dimension_semantics=("parallel", "parallel"),
            vmem_limit_bytes=32 << 20,
        ),
    )(x2, g_full, b_full)
    return out.reshape(N, C, D, H, W)


if __name__ == "__main__":
    group_num = 8
    eps = 1e-10
    N, C, D, H, W = 2, group_num, group_num, 16, 16

    key = jax.random.PRNGKey(0)
    kx, kg = jax.random.split(key)
    x = jax.random.normal(kx, (N, C, D, H, W), dtype=jnp.float32)
    # Parameters initialized deterministically in-script (shapes from __init__).
    gamma = jax.random.normal(kg, (group_num, 1, 1, 1), dtype=jnp.float32)
    beta = jnp.zeros((group_num, 1, 1, 1), dtype=jnp.float32)

    out = deep_normal_3d(x, gamma, beta, group_num=group_num, eps=eps)
    out = jax.block_until_ready(out)

    # Pure-JAX reference mirroring the PyTorch semantics (incl. unbiased std).
    xr = x.reshape(N, group_num * C, H, W)
    mean = xr.mean(axis=1, keepdims=True)
    std = jnp.sqrt(jnp.sum((xr - mean) ** 2, axis=1, keepdims=True) / (group_num * C - 1))
    ref = ((xr - mean) / (std + eps)).reshape(N, C, D, H, W) * gamma + beta

    assert out.shape == (N, C, D, H, W)
    assert jnp.allclose(out, ref, atol=1e-5, rtol=1e-5)
    print("KERNEL_OK")
</pallas_src>

<mosaic_0001>
module attributes {stable_mosaic.version = 11 : i64} {
  func.func @_deepnormal_kernel(%arg0: i32, %arg1: i32, %arg2: memref<2x64x256xf32, #tpu.memory_space<vmem>>, %arg3: memref<64x1xf32, #tpu.memory_space<vmem>>, %arg4: memref<64x1xf32, #tpu.memory_space<vmem>>, %arg5: memref<2x64x256xf32, #tpu.memory_space<vmem>>) attributes {dimension_semantics = [#tpu.dimension_semantics<parallel>, #tpu.dimension_semantics<parallel>], iteration_bounds = array<i64: 1, 1>, scalar_prefetch = 0 : i64, scratch_operands = 0 : i64, tpu.core_type = #tpu.core_type<tc>, window_params = [{transform_indices = @transform_0, window_bounds = array<i64: 2, 64, 256>}, {pipeline_mode = #tpu.pipeline_mode<synchronous>, transform_indices = @transform_1, window_bounds = array<i64: 64, 1>}, {pipeline_mode = #tpu.pipeline_mode<synchronous>, transform_indices = @transform_2, window_bounds = array<i64: 64, 1>}, {transform_indices = @transform_3, window_bounds = array<i64: 2, 64, 256>}]} {
    %c0 = arith.constant 0 : index
    %c0_0 = arith.constant 0 : index
    %c0_1 = arith.constant 0 : index
    %0 = vector.load %arg2[%c0, %c0_0, %c0_1] : memref<2x64x256xf32, #tpu.memory_space<vmem>>, vector<2x64x256xf32>
    %cst = arith.constant dense<0.000000e+00> : vector<2x256xf32>
    %1 = vector.multi_reduction <add>, %0, %cst [1] : vector<2x64x256xf32> to vector<2x256xf32>
    %2 = vector.shape_cast %1 : vector<2x256xf32> to vector<2x1x256xf32>
    %cst_2 = arith.constant 6.400000e+01 : f32
    %3 = vector.broadcast %cst_2 : f32 to vector<2x1x256xf32>
    %4 = arith.divf %2, %3 : vector<2x1x256xf32>
    %5 = vector.broadcast %4 : vector<2x1x256xf32> to vector<2x64x256xf32>
    %6 = arith.subf %0, %5 : vector<2x64x256xf32>
    %7 = arith.mulf %6, %6 : vector<2x64x256xf32>
    %cst_3 = arith.constant dense<0.000000e+00> : vector<2x256xf32>
    %8 = vector.multi_reduction <add>, %7, %cst_3 [1] : vector<2x64x256xf32> to vector<2x256xf32>
    %9 = vector.shape_cast %8 : vector<2x256xf32> to vector<2x1x256xf32>
    %cst_4 = arith.constant 0.0158730168 : f32
    %10 = vector.broadcast %cst_4 : f32 to vector<2x1x256xf32>
    %11 = arith.mulf %9, %10 : vector<2x1x256xf32>
    %12 = math.sqrt %11 : vector<2x1x256xf32>
    %cst_5 = arith.constant 1.000000e-10 : f32
    %13 = vector.broadcast %cst_5 : f32 to vector<2x1x256xf32>
    %14 = arith.addf %12, %13 : vector<2x1x256xf32>
    %15 = tpu.reciprocal %14 {approx = true} : vector<2x1x256xf32> -> vector<2x1x256xf32>
    %16 = arith.mulf %14, %15 : vector<2x1x256xf32>
    %cst_6 = arith.constant 2.000000e+00 : f32
    %17 = vector.broadcast %cst_6 : f32 to vector<2x1x256xf32>
    %18 = arith.subf %17, %16 : vector<2x1x256xf32>
    %19 = arith.mulf %15, %18 : vector<2x1x256xf32>
    %20 = arith.mulf %14, %19 : vector<2x1x256xf32>
    %cst_7 = arith.constant 2.000000e+00 : f32
    %21 = vector.broadcast %cst_7 : f32 to vector<2x1x256xf32>
    %22 = arith.subf %21, %20 : vector<2x1x256xf32>
    %23 = arith.mulf %19, %22 : vector<2x1x256xf32>
    %c0_8 = arith.constant 0 : index
    %c0_9 = arith.constant 0 : index
    %24 = vector.load %arg3[%c0_8, %c0_9] : memref<64x1xf32, #tpu.memory_space<vmem>>, vector<64x1xf32>
    %25 = vector.shape_cast %24 : vector<64x1xf32> to vector<1x64x1xf32>
    %26 = vector.broadcast %25 : vector<1x64x1xf32> to vector<2x64x256xf32>
    %27 = vector.broadcast %23 : vector<2x1x256xf32> to vector<2x64x256xf32>
    %28 = arith.mulf %26, %27 : vector<2x64x256xf32>
    %29 = arith.mulf %6, %28 : vector<2x64x256xf32>
    %c0_10 = arith.constant 0 : index
    %c0_11 = arith.constant 0 : index
    %30 = vector.load %arg4[%c0_10, %c0_11] : memref<64x1xf32, #tpu.memory_space<vmem>>, vector<64x1xf32>
    %31 = vector.shape_cast %30 : vector<64x1xf32> to vector<1x64x1xf32>
    %32 = vector.broadcast %31 : vector<1x64x1xf32> to vector<2x64x256xf32>
    %33 = arith.addf %29, %32 : vector<2x64x256xf32>
    %c0_12 = arith.constant 0 : index
    %c0_13 = arith.constant 0 : index
    %c0_14 = arith.constant 0 : index
    %34 = vector.load %arg5[%c0_12, %c0_13, %c0_14] : memref<2x64x256xf32, #tpu.memory_space<vmem>>, vector<2x64x256xf32>
    tpu.vector_store %arg5[%c0_12, %c0_13, %c0_14], %33 {strides = array<i32>} : memref<2x64x256xf32, #tpu.memory_space<vmem>>, vector<2x64x256xf32>,
    return
  }
  func.func @transform_0(%arg0: i32, %arg1: i32) -> (i32, i32, i32) {
    %c0_i32 = arith.constant 0 : i32
    %c0_i32_0 = arith.constant 0 : i32
    return %arg0, %c0_i32, %arg1 : i32, i32, i32
  }
  func.func @transform_1(%arg0: i32, %arg1: i32) -> (i32, i32) {
    %c0_i32 = arith.constant 0 : i32
    %c0_i32_0 = arith.constant 0 : i32
    %c0_i32_1 = arith.constant 0 : i32
    return %c0_i32, %c0_i32_0 : i32, i32
  }
  func.func @transform_2(%arg0: i32, %arg1: i32) -> (i32, i32) {
    %c0_i32 = arith.constant 0 : i32
    %c0_i32_0 = arith.constant 0 : i32
    %c0_i32_1 = arith.constant 0 : i32
    return %c0_i32, %c0_i32_0 : i32, i32
  }
  func.func @transform_3(%arg0: i32, %arg1: i32) -> (i32, i32, i32) {
    %c0_i32 = arith.constant 0 : i32
    %c0_i32_0 = arith.constant 0 : i32
    return %arg0, %c0_i32, %arg1 : i32, i32, i32
  }
}

</mosaic_0001>

<llo_original>
// kernel: tpu_custom_call.1
$region0: #{tpu_custom_call.1}
  #allocation0 [shape = 'u32[]', space=smem, size = 0x4, offset = 0x4, fixed_abs, tag = 'smem constant byte address 0x4 - core index']
  #allocation1 [shape = 'u32[72,128]{1,0:T(1,128)}', space=vmem, size = 0x9000, scoped, tag = 'internal scratch']
  %s0 = inlined_call_operand.hbm [shape: f32[2,64,256], index: 0, kind: input, shape index: {}]
  %s1 = inlined_call_operand.vmem [shape: f32[64,1], index: 1, kind: input, shape index: {}]
  %s2 = inlined_call_operand.vmem [shape: f32[64,1], index: 2, kind: input, shape index: {}]
  %s3 = inlined_call_operand.hbm [shape: f32[2,64,256], index: 3, kind: output, shape index: {}]
  %s4 = sld [smem:[#allocation0]]
  $region26: #{tpu_custom_call.1} parent=0
    _
  %s6 = ssub.s32 1, %s4
  %s7 = scalar_select 0, %s6, %s4
  $region1: #{tpu_custom_call.1} parent=0
    #allocation2 [shape = 'u8[131072]{0}', space=vmem, size = 0x20000, scoped, tag = 'input window, operand 0, single buffered']
    #allocation3 [shape = 's32[1]{0}', space=sflag, size = 0x4, scoped, tag = 'scoped memory for tpu_custom_call.1']
    #allocation4 [shape = 's32[1]{0}', space=sflag, size = 0x4, scoped, tag = 'scoped memory for tpu_custom_call.1']
    #allocation5 [shape = 'u8[131072]{0}', space=vmem, size = 0x20000, scoped, tag = 'output window, operand 0, single buffered']
    %8 = vsyncpa [#allocation3], 0
    %9 = vsyncpa [#allocation4], 0
    // Predicated region
    $region2: #{tpu_custom_call.1} parent=1 // pred_check
      _
    $region3: #{tpu_custom_call.1} parent=1 // pred_check_branch
      %11 = sbr.rel (0) target = $region5
    $region4: #{tpu_custom_call.1} parent=1 // pred_region
      %13 = vsyncadd [#allocation3], 0
      %s14 = sshll.u32 %s0, 4
      %s15 = int_to_ptr.hbm [resolvable:$true] %s14
      %s16 = sshll.u32 [#allocation2], 4
      %s17 = int_to_ptr.vmem [resolvable:$true] %s16
      %22 = dma.hbm_to_vmem [thread:$0]  %s15, 4096, %s17, [#allocation3], 256, 256, 16
    $region5: #{tpu_custom_call.1} parent=1 // pred_fallthru
      _
    // Predicated region
    $region6: #{tpu_custom_call.1} parent=1 // pred_check
      _
    $region7: #{tpu_custom_call.1} parent=1 // pred_check_branch
      %24 = sbr.rel (0) target = $region9
    $region8: #{tpu_custom_call.1} parent=1 // pred_region
      _
    $region9: #{tpu_custom_call.1} parent=1 // pred_fallthru
      _
    // Predicated region
    $region10: #{tpu_custom_call.1} parent=1 // pred_check
      _
    $region11: #{tpu_custom_call.1} parent=1 // pred_check_branch
      %26 = sbr.rel (0) target = $region13
    $region12: #{tpu_custom_call.1} parent=1 // pred_region
      _
    $region13: #{tpu_custom_call.1} parent=1 // pred_fallthru
      _
    // Predicated region
    $region14: #{tpu_custom_call.1} parent=1 // pred_check
      _
    $region15: #{tpu_custom_call.1} parent=1 // pred_check_branch
      %28 = sbr.rel (0) target = $region17
    $region16: #{tpu_custom_call.1} parent=1 // pred_region
      %30 = dma.done [#allocation3], 4096
    $region17: #{tpu_custom_call.1} parent=1 // pred_fallthru
      _
    %v31 = vld [vmem:[#allocation2] sm:$0xff]
    %v32 = vld [vmem:[#allocation2 + $0x8] sm:$0xff]
    %v33 = vld [vmem:[#allocation2 + $0x10] sm:$0xff]
    %v34 = vld [vmem:[#allocation2 + $0x18] sm:$0xff]
    %v35 = vld [vmem:[#allocation2 + $0x20] sm:$0xff]
    %v36 = vld [vmem:[#allocation2 + $0x28] sm:$0xff]
    %v37 = vld [vmem:[#allocation2 + $0x30] sm:$0xff]
    %v38 = vld [vmem:[#allocation2 + $0x38] sm:$0xff]
    %v39 = vld [vmem:[#allocation2 + $0x40] sm:$0xff]
    %v40 = vld [vmem:[#allocation2 + $0x48] sm:$0xff]
    %v41 = vld [vmem:[#allocation2 + $0x50] sm:$0xff]
    %v42 = vld [vmem:[#allocation2 + $0x58] sm:$0xff]
    %v43 = vld [vmem:[#allocation2 + $0x60] sm:$0xff]
    %v44 = vld [vmem:[#allocation2 + $0x68] sm:$0xff]
    %v45 = vld [vmem:[#allocation2 + $0x70] sm:$0xff]
    %v46 = vld [vmem:[#allocation2 + $0x78] sm:$0xff]
    %v47 = vld [vmem:[#allocation2 + $0x80] sm:$0xff]
    %v48 = vld [vmem:[#allocation2 + $0x88] sm:$0xff]
    %v49 = vld [vmem:[#allocation2 + $0x90] sm:$0xff]
    %v50 = vld [vmem:[#allocation2 + $0x98] sm:$0xff]
    %v51 = vld [vmem:[#allocation2 + $0xa0] sm:$0xff]
    %v52 = vld [vmem:[#allocation2 + $0xa8] sm:$0xff]
    %v53 = vld [vmem:[#allocation2 + $0xb0] sm:$0xff]
    %v54 = vld [vmem:[#allocation2 + $0xb8] sm:$0xff]
    %v55 = vld [vmem:[#allocation2 + $0xc0] sm:$0xff]
    %v56 = vld [vmem:[#allocation2 + $0xc8] sm:$0xff]
    %v57 = vld [vmem:[#allocation2 + $0xd0] sm:$0xff]
    %v58 = vld [vmem:[#allocation2 + $0xd8] sm:$0xff]
    %v59 = vld [vmem:[#allocation2 + $0xe0] sm:$0xff]
    %v60 = vld [vmem:[#allocation2 + $0xe8] sm:$0xff]
    %v61 = vld [vmem:[#allocation2 + $0xf0] sm:$0xff]
    %v62 = vld [vmem:[#allocation2 + $0xf8] sm:$0xff]
    %v63 = vadd.f32 %v31, %v33
    %v64 = vadd.f32 %v63, %v35
    %v65 = vadd.f32 %v64, %v37
    %v66 = vadd.f32 %v65, %v39
    %v67 = vadd.f32 %v66, %v41
    %v68 = vadd.f32 %v67, %v43
    %v69 = vadd.f32 %v68, %v45
    %v70 = vrot.slane %v69, 4
    %v71 = vadd.f32 %v69, %v70
    %v72 = vrot.slane %v71, 2
    %v73 = vadd.f32 %v71, %v72
    %v74 = vrot.slane %v73, 1
    %v75 = vadd.f32 %v73, %v74
    %v76 = vadd.f32 %v32, %v34
    %v77 = vadd.f32 %v76, %v36
    %v78 = vadd.f32 %v77, %v38
    %v79 = vadd.f32 %v78, %v40
    %v80 = vadd.f32 %v79, %v42
    %v81 = vadd.f32 %v80, %v44
    %v82 = vadd.f32 %v81, %v46
    %v83 = vrot.slane %v82, 4
    %v84 = vadd.f32 %v82, %v83
    %v85 = vrot.slane %v84, 2
    %v86 = vadd.f32 %v84, %v85
    %v87 = vrot.slane %v86, 1
    %v88 = vadd.f32 %v86, %v87
    %v89 = vadd.f32 %v47, %v49
    %v90 = vadd.f32 %v89, %v51
    %v91 = vadd.f32 %v90, %v53
    %v92 = vadd.f32 %v91, %v55
    %v93 = vadd.f32 %v92, %v57
    %v94 = vadd.f32 %v93, %v59
    %v95 = vadd.f32 %v94, %v61
    %v96 = vrot.slane %v95, 4
    %v97 = vadd.f32 %v95, %v96
    %v98 = vrot.slane %v97, 2
    %v99 = vadd.f32 %v97, %v98
    %v100 = vrot.slane %v99, 1
    %v101 = vadd.f32 %v99, %v100
    %v102 = vadd.f32 %v48, %v50
    %v103 = vadd.f32 %v102, %v52
    %v104 = vadd.f32 %v103, %v54
    %v105 = vadd.f32 %v104, %v56
    %v106 = vadd.f32 %v105, %v58
    %v107 = vadd.f32 %v106, %v60
    %v108 = vadd.f32 %v107, %v62
    %v109 = vrot.slane %v108, 4
    %v110 = vadd.f32 %v108, %v109
    %v111 = vrot.slane %v110, 2
    %v112 = vadd.f32 %v110, %v111
    %v113 = vrot.slane %v112, 1
    %v114 = vadd.f32 %v112, %v113
    %v115 = vrcp.pop 64.0
    %v116 = vmul.f32 64.0, %v115
    %v117 = vsub.f32 1.0, %v116
    %v118 = vmul.f32 %v115, %v117
    %v119 = vadd.f32 %v115, %v118
    %vm120 = vweird.f32 %v115
    %v121 = vsel %vm120, %v115, %v119
    %v122 = vmul.f32 %v75, %v121
    %v123 = vmul.f32 %v88, %v121
    %v124 = vmul.f32 %v101, %v121
    %v125 = vmul.f32 %v114, %v121
    %v126 = vsub.f32 %v31, %v122
    %v127 = vsub.f32 %v32, %v123
    %v128 = vsub.f32 %v33, %v122
    %v129 = vsub.f32 %v34, %v123
    %v130 = vsub.f32 %v35, %v122
    %v131 = vsub.f32 %v36, %v123
    %v132 = vsub.f32 %v37, %v122
    %v133 = vsub.f32 %v38, %v123
    %v134 = vsub.f32 %v39, %v122
    %v135 = vsub.f32 %v40, %v123
    %v136 = vsub.f32 %v41, %v122
    %v137 = vsub.f32 %v42, %v123
    %v138 = vsub.f32 %v43, %v122
    %v139 = vsub.f32 %v44, %v123
    %v140 = vsub.f32 %v45, %v122
    %v141 = vsub.f32 %v46, %v123
    %v142 = vsub.f32 %v47, %v124
    %v143 = vsub.f32 %v48, %v125
    %v144 = vsub.f32 %v49, %v124
    %v145 = vsub.f32 %v50, %v125
    %v146 = vsub.f32 %v51, %v124
    %v147 = vsub.f32 %v52, %v125
    %v148 = vsub.f32 %v53, %v124
    %v149 = vsub.f32 %v54, %v125
    %v150 = vsub.f32 %v55, %v124
    %v151 = vsub.f32 %v56, %v125
    %v152 = vsub.f32 %v57, %v124
    %v153 = vsub.f32 %v58, %v125
    %v154 = vsub.f32 %v59, %v124
    %v155 = vsub.f32 %v60, %v125
    %v156 = vsub.f32 %v61, %v124
    %v157 = vsub.f32 %v62, %v125
    %v158 = vmul.f32 %v126, %v126
    %v159 = vmul.f32 %v127, %v127
    %v160 = vmul.f32 %v128, %v128
    %v161 = vmul.f32 %v129, %v129
    %v162 = vmul.f32 %v130, %v130
    %v163 = vmul.f32 %v131, %v131
    %v164 = vmul.f32 %v132, %v132
    %v165 = vmul.f32 %v133, %v133
    %v166 = vmul.f32 %v134, %v134
    %v167 = vmul.f32 %v135, %v135
    %v168 = vmul.f32 %v136, %v136
    %v169 = vmul.f32 %v137, %v137
    %v170 = vmul.f32 %v138, %v138
    %v171 = vmul.f32 %v139, %v139
    %v172 = vmul.f32 %v140, %v140
    %v173 = vmul.f32 %v141, %v141
    %v174 = vmul.f32 %v142, %v142
    %v175 = vmul.f32 %v143, %v143
    %v176 = vmul.f32 %v144, %v144
    %v177 = vmul.f32 %v145, %v145
    %v178 = vmul.f32 %v146, %v146
    %v179 = vmul.f32 %v147, %v147
    %v180 = vmul.f32 %v148, %v148
    %v181 = vmul.f32 %v149, %v149
    %v182 = vmul.f32 %v150, %v150
    %v183 = vmul.f32 %v151, %v151
    %v184 = vmul.f32 %v152, %v152
    %v185 = vmul.f32 %v153, %v153
    %v186 = vmul.f32 %v154, %v154
    %v187 = vmul.f32 %v155, %v155
    %v188 = vmul.f32 %v156, %v156
    %v189 = vmul.f32 %v157, %v157
    %v190 = vadd.f32 %v158, %v160
    %v191 = vadd.f32 %v190, %v162
    %v192 = vadd.f32 %v191, %v164
    %v193 = vadd.f32 %v192, %v166
    %v194 = vadd.f32 %v193, %v168
    %v195 = vadd.f32 %v194, %v170
    %v196 = vadd.f32 %v195, %v172
    %v197 = vrot.slane %v196, 4
    %v198 = vadd.f32 %v196, %v197
    %v199 = vrot.slane %v198, 2
    %v200 = vadd.f32 %v198, %v199
    %v201 = vrot.slane %v200, 1
    %v202 = vadd.f32 %v200, %v201
    %v203 = vadd.f32 %v159, %v161
    %v204 = vadd.f32 %v203, %v163
    %v205 = vadd.f32 %v204, %v165
    %v206 = vadd.f32 %v205, %v167
    %v207 = vadd.f32 %v206, %v169
    %v208 = vadd.f32 %v207, %v171
    %v209 = vadd.f32 %v208, %v173
    %v210 = vrot.slane %v209, 4
    %v211 = vadd.f32 %v209, %v210
    %v212 = vrot.slane %v211, 2
    %v213 = vadd.f32 %v211, %v212
    %v214 = vrot.slane %v213, 1
    %v215 = vadd.f32 %v213, %v214
    %v216 = vadd.f32 %v174, %v176
    %v217 = vadd.f32 %v216, %v178
    %v218 = vadd.f32 %v217, %v180
    %v219 = vadd.f32 %v218, %v182
    %v220 = vadd.f32 %v219, %v184
    %v221 = vadd.f32 %v220, %v186
    %v222 = vadd.f32 %v221, %v188
    %v223 = vrot.slane %v222, 4
    %v224 = vadd.f32 %v222, %v223
    %v225 = vrot.slane %v224, 2
    %v226 = vadd.f32 %v224, %v225
    %v227 = vrot.slane %v226, 1
    %v228 = vadd.f32 %v226, %v227
    %v229 = vadd.f32 %v175, %v177
    %v230 = vadd.f32 %v229, %v179
    %v231 = vadd.f32 %v230, %v181
    %v232 = vadd.f32 %v231, %v183
    %v233 = vadd.f32 %v232, %v185
    %v234 = vadd.f32 %v233, %v187
    %v235 = vadd.f32 %v234, %v189
    %v236 = vrot.slane %v235, 4
    %v237 = vadd.f32 %v235, %v236
    %v238 = vrot.slane %v237, 2
    %v239 = vadd.f32 %v237, %v238
    %v240 = vrot.slane %v239, 1
    %v241 = vadd.f32 %v239, %v240
    %v242 = vmul.f32 %v202, 0.015873017
    %v243 = vmul.f32 %v215, 0.015873017
    %v244 = vmul.f32 %v228, 0.015873017
    %v245 = vmul.f32 %v241, 0.015873017
    %v246 = vrsqrt.pop %v242
    %v247 = vmul.f32 %v246, %v242
    %v248 = vmul.f32 %v247, %v246
    %v249 = vmul.f32 0.5, %v248
    %v250 = vsub.f32 1.5, %v249
    %v251 = vmul.f32 %v246, %v250
    %v252 = vmul.f32 %v242, %v251
    %vm253 = vcmp.eq.f32.partialorder %v242, inf
    %v254 = vsel %vm253, %v242, %v252
    %vm255 = vcmp.eq.f32.partialorder %v242, 0.0
    %v256 = vand.u32 %v242, 2147483648
    %v257 = vsel %vm255, %v256, %v254
    %v258 = vrsqrt.pop %v243
    %v259 = vmul.f32 %v258, %v243
    %v260 = vmul.f32 %v259, %v258
    %v261 = vmul.f32 0.5, %v260
    %v262 = vsub.f32 1.5, %v261
    %v263 = vmul.f32 %v258, %v262
    %v264 = vmul.f32 %v243, %v263
    %vm265 = vcmp.eq.f32.partialorder %v243, inf
    %v266 = vsel %vm265, %v243, %v264
    %vm267 = vcmp.eq.f32.partialorder %v243, 0.0
    %v268 = vand.u32 %v243, 2147483648
    %v269 = vsel %vm267, %v268, %v266
    %v270 = vrsqrt.pop %v244
    %v271 = vmul.f32 %v270, %v244
    %v272 = vmul.f32 %v271, %v270
    %v273 = vmul.f32 0.5, %v272
    %v274 = vsub.f32 1.5, %v273
    %v275 = vmul.f32 %v270, %v274
    %v276 = vmul.f32 %v244, %v275
    %vm277 = vcmp.eq.f32.partialorder %v244, inf
    %v278 = vsel %vm277, %v244, %v276
    %vm279 = vcmp.eq.f32.partialorder %v244, 0.0
    %v280 = vand.u32 %v244, 2147483648
    %v281 = vsel %vm279, %v280, %v278
    %v282 = vrsqrt.pop %v245
    %v283 = vmul.f32 %v282, %v245
    %v284 = vmul.f32 %v283, %v282
    %v285 = vmul.f32 0.5, %v284
    %v286 = vsub.f32 1.5, %v285
    %v287 = vmul.f32 %v282, %v286
    %v288 = vmul.f32 %v245, %v287
    %vm289 = vcmp.eq.f32.partialorder %v245, inf
    %v290 = vsel %vm289, %v245, %v288
    %vm291 = vcmp.eq.f32.partialorder %v245, 0.0
    %v292 = vand.u32 %v245, 2147483648
    %v293 = vsel %vm291, %v292, %v290
    %v294 = vadd.f32 %v257, 1e-10
    %v295 = vadd.f32 %v269, 1e-10
    %v296 = vadd.f32 %v281, 1e-10
    %v297 = vadd.f32 %v293, 1e-10
    %v298 = vrcp.pop %v294
    %v299 = vrcp.pop %v295
    %v300 = vrcp.pop %v296
    %v301 = vrcp.pop %v297
    %v302 = vmul.f32 %v294, %v298
    %v303 = vmul.f32 %v295, %v299
    %v304 = vmul.f32 %v296, %v300
    %v305 = vmul.f32 %v297, %v301
    %v306 = vsub.f32 2.0, %v302
    %v307 = vsub.f32 2.0, %v303
    %v308 = vsub.f32 2.0, %v304
    %v309 = vsub.f32 2.0, %v305
    %v310 = vmul.f32 %v298, %v306
    %v311 = vmul.f32 %v299, %v307
    %v312 = vmul.f32 %v300, %v308
    %v313 = vmul.f32 %v301, %v309
    %v314 = vmul.f32 %v294, %v310
    %v315 = vmul.f32 %v295, %v311
    %v316 = vmul.f32 %v296, %v312
    %v317 = vmul.f32 %v297, %v313
    %v318 = vsub.f32 2.0, %v314
    %v319 = vsub.f32 2.0, %v315
    %v320 = vsub.f32 2.0, %v316
    %v321 = vsub.f32 2.0, %v317
    %v322 = vmul.f32 %v310, %v318
    %v323 = vmul.f32 %v311, %v319
    %v324 = vmul.f32 %v312, %v320
    %v325 = vmul.f32 %v313, %v321
    %v326 = vld [vmem:[%s1] sm:$0xff]
    %v327 = vld [vmem:[%s1 + $0x8] sm:$0xff]
    %v328 = vld [vmem:[%s1 + $0x10] sm:$0xff]
    %v329 = vld [vmem:[%s1 + $0x18] sm:$0xff]
    %v330 = vld [vmem:[%s1 + $0x20] sm:$0xff]
    %v331 = vld [vmem:[%s1 + $0x28] sm:$0xff]
    %v332 = vld [vmem:[%s1 + $0x30] sm:$0xff]
    %v333 = vld [vmem:[%s1 + $0x38] sm:$0xff]
    %335 = vset.pattern.permute.xlu0 0
    %336 = vperm.xlu0 %335, %v326
    %v337 = vpop.permute.xlu0 %336
    %340 = vset.pattern.permute.xlu0 0
    %341 = vperm.xlu0 %340, %v327
    %v342 = vpop.permute.xlu0 %341
    %345 = vset.pattern.permute.xlu0 0
    %346 = vperm.xlu0 %345, %v328
    %v347 = vpop.permute.xlu0 %346
    %350 = vset.pattern.permute.xlu0 0
    %351 = vperm.xlu0 %350, %v329
    %v352 = vpop.permute.xlu0 %351
    %355 = vset.pattern.permute.xlu0 0
    %356 = vperm.xlu0 %355, %v330
    %v357 = vpop.permute.xlu0 %356
    %360 = vset.pattern.permute.xlu0 0
    %361 = vperm.xlu0 %360, %v331
    %v362 = vpop.permute.xlu0 %361
    %365 = vset.pattern.permute.xlu0 0
    %366 = vperm.xlu0 %365, %v332
    %v367 = vpop.permute.xlu0 %366
    %370 = vset.pattern.permute.xlu0 0
    %371 = vperm.xlu0 %370, %v333
    %v372 = vpop.permute.xlu0 %371
    %v374 = vmul.f32 %v337, %v322
    %v375 = vmul.f32 %v337, %v323
    %v376 = vmul.f32 %v342, %v322
    %v377 = vmul.f32 %v342, %v323
    %v378 = vmul.f32 %v347, %v322
    %v379 = vmul.f32 %v347, %v323
    %v380 = vmul.f32 %v352, %v322
    %v381 = vmul.f32 %v352, %v323
    %v382 = vmul.f32 %v357, %v322
    %v383 = vmul.f32 %v357, %v323
    %v384 = vmul.f32 %v362, %v322
    %v385 = vmul.f32 %v362, %v323
    %v386 = vmul.f32 %v367, %v322
    %v387 = vmul.f32 %v367, %v323
    %v388 = vmul.f32 %v372, %v322
    %v389 = vmul.f32 %v372, %v323
    %v390 = vmul.f32 %v337, %v324
    %v391 = vmul.f32 %v337, %v325
    %v392 = vmul.f32 %v342, %v324
    %v393 = vmul.f32 %v342, %v325
    %v394 = vmul.f32 %v347, %v324
    %v395 = vmul.f32 %v347, %v325
    %v396 = vmul.f32 %v352, %v324
    %v397 = vmul.f32 %v352, %v325
    %v398 = vmul.f32 %v357, %v324
    %v399 = vmul.f32 %v357, %v325
    %v400 = vmul.f32 %v362, %v324
    %v401 = vmul.f32 %v362, %v325
    %v402 = vmul.f32 %v367, %v324
    %v403 = vmul.f32 %v367, %v325
    %v404 = vmul.f32 %v372, %v324
    %v405 = vmul.f32 %v372, %v325
    %v406 = vmul.f32 %v126, %v374
    %v407 = vmul.f32 %v127, %v375
    %v408 = vmul.f32 %v128, %v376
    %v409 = vmul.f32 %v129, %v377
    %v410 = vmul.f32 %v130, %v378
    %v411 = vmul.f32 %v131, %v379
    %v412 = vmul.f32 %v132, %v380
    %v413 = vmul.f32 %v133, %v381
    %v414 = vmul.f32 %v134, %v382
    %v415 = vmul.f32 %v135, %v383
    %v416 = vmul.f32 %v136, %v384
    %v417 = vmul.f32 %v137, %v385
    %v418 = vmul.f32 %v138, %v386
    %v419 = vmul.f32 %v139, %v387
    %v420 = vmul.f32 %v140, %v388
    %v421 = vmul.f32 %v141, %v389
    %v422 = vmul.f32 %v142, %v390
    %v423 = vmul.f32 %v143, %v391
    %v424 = vmul.f32 %v144, %v392
    %v425 = vmul.f32 %v145, %v393
    %v426 = vmul.f32 %v146, %v394
    %v427 = vmul.f32 %v147, %v395
    %v428 = vmul.f32 %v148, %v396
    %v429 = vmul.f32 %v149, %v397
    %v430 = vmul.f32 %v150, %v398
    %v431 = vmul.f32 %v151, %v399
    %v432 = vmul.f32 %v152, %v400
    %v433 = vmul.f32 %v153, %v401
    %v434 = vmul.f32 %v154, %v402
    %v435 = vmul.f32 %v155, %v403
    %v436 = vmul.f32 %v156, %v404
    %v437 = vmul.f32 %v157, %v405
    %v438 = vld [vmem:[%s2] sm:$0xff]
    %v439 = vld [vmem:[%s2 + $0x8] sm:$0xff]
    %v440 = vld [vmem:[%s2 + $0x10] sm:$0xff]
    %v441 = vld [vmem:[%s2 + $0x18] sm:$0xff]
    %v442 = vld [vmem:[%s2 + $0x20] sm:$0xff]
    %v443 = vld [vmem:[%s2 + $0x28] sm:$0xff]
    %v444 = vld [vmem:[%s2 + $0x30] sm:$0xff]
    %v445 = vld [vmem:[%s2 + $0x38] sm:$0xff]
    %447 = vset.pattern.permute.xlu0 0
    %448 = vperm.xlu0 %447, %v438
    %v449 = vpop.permute.xlu0 %448
    %452 = vset.pattern.permute.xlu0 0
    %453 = vperm.xlu0 %452, %v439
    %v454 = vpop.permute.xlu0 %453
    %457 = vset.pattern.permute.xlu0 0
    %458 = vperm.xlu0 %457, %v440
    %v459 = vpop.permute.xlu0 %458
    %462 = vset.pattern.permute.xlu0 0
    %463 = vperm.xlu0 %462, %v441
    %v464 = vpop.permute.xlu0 %463
    %467 = vset.pattern.permute.xlu0 0
    %468 = vperm.xlu0 %467, %v442
    %v469 = vpop.permute.xlu0 %468
    %472 = vset.pattern.permute.xlu0 0
    %473 = vperm.xlu0 %472, %v443
    %v474 = vpop.permute.xlu0 %473
    %477 = vset.pattern.permute.xlu0 0
    %478 = vperm.xlu0 %477, %v444
    %v479 = vpop.permute.xlu0 %478
    %482 = vset.pattern.permute.xlu0 0
    %483 = vperm.xlu0 %482, %v445
    %v484 = vpop.permute.xlu0 %483
    %v486 = vadd.f32 %v406, %v449
    %v487 = vadd.f32 %v407, %v449
    %v488 = vadd.f32 %v408, %v454
    %v489 = vadd.f32 %v409, %v454
    %v490 = vadd.f32 %v410, %v459
    %v491 = vadd.f32 %v411, %v459
    %v492 = vadd.f32 %v412, %v464
    %v493 = vadd.f32 %v413, %v464
    %v494 = vadd.f32 %v414, %v469
    %v495 = vadd.f32 %v415, %v469
    %v496 = vadd.f32 %v416, %v474
    %v497 = vadd.f32 %v417, %v474
    %v498 = vadd.f32 %v418, %v479
    %v499 = vadd.f32 %v419, %v479
    %v500 = vadd.f32 %v420, %v484
    %v501 = vadd.f32 %v421, %v484
    %v502 = vadd.f32 %v422, %v449
    %v503 = vadd.f32 %v423, %v449
    %v504 = vadd.f32 %v424, %v454
    %v505 = vadd.f32 %v425, %v454
    %v506 = vadd.f32 %v426, %v459
    %v507 = vadd.f32 %v427, %v459
    %v508 = vadd.f32 %v428, %v464
    %v509 = vadd.f32 %v429, %v464
    %v510 = vadd.f32 %v430, %v469
    %v511 = vadd.f32 %v431, %v469
    %v512 = vadd.f32 %v432, %v474
    %v513 = vadd.f32 %v433, %v474
    %v514 = vadd.f32 %v434, %v479
    %v515 = vadd.f32 %v435, %v479
    %v516 = vadd.f32 %v436, %v484
    %v517 = vadd.f32 %v437, %v484
    %518 = vst [vmem:[#allocation5] sm:$0xff] %v486
    %519 = vst [vmem:[#allocation5 + $0x8] sm:$0xff] %v487
    %520 = vst [vmem:[#allocation5 + $0x10] sm:$0xff] %v488
    %521 = vst [vmem:[#allocation5 + $0x18] sm:$0xff] %v489
    %522 = vst [vmem:[#allocation5 + $0x20] sm:$0xff] %v490
    %523 = vst [vmem:[#allocation5 + $0x28] sm:$0xff] %v491
    %524 = vst [vmem:[#allocation5 + $0x30] sm:$0xff] %v492
    %525 = vst [vmem:[#allocation5 + $0x38] sm:$0xff] %v493
    %526 = vst [vmem:[#allocation5 + $0x40] sm:$0xff] %v494
    %527 = vst [vmem:[#allocation5 + $0x48] sm:$0xff] %v495
    %528 = vst [vmem:[#allocation5 + $0x50] sm:$0xff] %v496
    %529 = vst [vmem:[#allocation5 + $0x58] sm:$0xff] %v497
    %530 = vst [vmem:[#allocation5 + $0x60] sm:$0xff] %v498
    %531 = vst [vmem:[#allocation5 + $0x68] sm:$0xff] %v499
    %532 = vst [vmem:[#allocation5 + $0x70] sm:$0xff] %v500
    %533 = vst [vmem:[#allocation5 + $0x78] sm:$0xff] %v501
    %534 = vst [vmem:[#allocation5 + $0x80] sm:$0xff] %v502
    %535 = vst [vmem:[#allocation5 + $0x88] sm:$0xff] %v503
    %536 = vst [vmem:[#allocation5 + $0x90] sm:$0xff] %v504
    %537 = vst [vmem:[#allocation5 + $0x98] sm:$0xff] %v505
    %538 = vst [vmem:[#allocation5 + $0xa0] sm:$0xff] %v506
    %539 = vst [vmem:[#allocation5 + $0xa8] sm:$0xff] %v507
    %540 = vst [vmem:[#allocation5 + $0xb0] sm:$0xff] %v508
    %541 = vst [vmem:[#allocation5 + $0xb8] sm:$0xff] %v509
    %542 = vst [vmem:[#allocation5 + $0xc0] sm:$0xff] %v510
    %543 = vst [vmem:[#allocation5 + $0xc8] sm:$0xff] %v511
    %544 = vst [vmem:[#allocation5 + $0xd0] sm:$0xff] %v512
    %545 = vst [vmem:[#allocation5 + $0xd8] sm:$0xff] %v513
    %546 = vst [vmem:[#allocation5 + $0xe0] sm:$0xff] %v514
    %547 = vst [vmem:[#allocation5 + $0xe8] sm:$0xff] %v515
    %548 = vst [vmem:[#allocation5 + $0xf0] sm:$0xff] %v516
    %549 = vst [vmem:[#allocation5 + $0xf8] sm:$0xff] %v517
    // Predicated region
    $region18: #{tpu_custom_call.1} parent=1 // pred_check
      _
    $region19: #{tpu_custom_call.1} parent=1 // pred_check_branch
      %551 = sbr.rel (0) target = $region21
    $region20: #{tpu_custom_call.1} parent=1 // pred_region
      %553 = vsyncadd [#allocation4], 0
      %s554 = sshll.u32 [#allocation5], 4
      %s555 = int_to_ptr.vmem [resolvable:$true] %s554
      %s556 = sshll.u32 %s3, 4
      %s557 = int_to_ptr.hbm [resolvable:$true] %s556
      %562 = dma.vmem_to_hbm [thread:$0]  %s555, 4096, %s557, [#allocation4], 256, 256, 16
    $region21: #{tpu_custom_call.1} parent=1 // pred_fallthru
      _
    // Predicated region
    $region22: #{tpu_custom_call.1} parent=1 // pred_check
      _
    $region23: #{tpu_custom_call.1} parent=1 // pred_check_branch
      %564 = sbr.rel (0) target = $region25
    $region24: #{tpu_custom_call.1} parent=1 // pred_region
      %566 = dma.done [#allocation4], 4096
    $region25: #{tpu_custom_call.1} parent=1 // pred_fallthru
      _
    %567 = vsyncpa [#allocation3], 1
    %568 = vsyncpa [#allocation4], 1

</llo_original>
